<compile_context>
chip_gen: v7x
topology: tpu7x:2x2x1
jax: 0.10.0
libtpu: 0.0.40
codegen_flags: <defaults>
</compile_context>

<pallas_src>
import functools

import jax
import jax.numpy as jnp
from jax.experimental import pallas as pl
from jax.experimental.pallas import tpu as pltpu


def _round_up(x: int, m: int) -> int:
    return ((x + m - 1) // m) * m


def _choose_tile_n(n: int, c: int, itemsize: int, max_tile_n: int) -> int:
    """Largest 128-multiple N-tile whose live VMEM footprint fits a ~12 MiB budget."""
    c_lanes = _round_up(c, 128)   # lane-padded width of the (tn, C) input tile in VMEM
    c_sub = _round_up(c, 8)       # sublane-padded height of the transposed f32 tile
    # Per-row live bytes: double-buffered input block + f32 cast copy of it
    # + ~3 f32 copies of the (C, tn) working tile (shifted / exp / select temporaries).
    bytes_per_row = 2 * c_lanes * itemsize + c_lanes * 4 + 3 * c_sub * 4
    budget = 12 * 1024 * 1024
    tn_budget = max(128, (budget // bytes_per_row) // 128 * 128)
    return max(128, min(max_tile_n, tn_budget, _round_up(n, 128)))


def _tw_ce_kernel(logits_ref, labels_ref, out_ref, *, n, tn, c,
                  transpose_tile, exp_in_bf16):
    pid = pl.program_id(0)
    logits = logits_ref[...].astype(jnp.float32)           # (tn, C) f32
    labels = labels_ref[...]                                # (1, tn) or (tn, 1) int32

    if transpose_tile:
        # Small C: go lane-dense.  (tn, C) -> (C, tn) runs on the XLU slot and cuts
        # the EUP/VALU work that previously ran over 128-lane-padded vregs.
        x = jnp.transpose(logits)                                        # (C, tn)
        red_axis = 0
        cls_ids = jax.lax.broadcasted_iota(jnp.int32, (c, tn), 0)        # class id per sublane
        row_ids = jax.lax.broadcasted_iota(jnp.int32, (1, tn), 1)        # batch row per lane
    else:
        # Large C: lanes already dense; keep the native layout (no transpose overhead).
        x = logits                                                        # (tn, C)
        red_axis = 1
        cls_ids = jax.lax.broadcasted_iota(jnp.int32, (tn, c), 1)
        row_ids = jax.lax.broadcasted_iota(jnp.int32, (tn, 1), 0)

    # Numerically-stable CE on the shifted logits only (the row max cancels between
    # logsumexp and the gathered true-class logit).
    x_max = jnp.max(x, axis=red_axis, keepdims=True)
    shifted = x - x_max
    if exp_in_bf16:
        # v6e/v7x only (bf16 EUP); keep the f32 path on v5e.
        p = jnp.exp(shifted.astype(jnp.bfloat16)).astype(jnp.float32)
    else:
        p = jnp.exp(shifted)
    lse = jnp.log(jnp.sum(p, axis=red_axis, keepdims=True))

    # where-select gather of the true-class shifted logit (no dynamic gather on TPU).
    true_shifted = jnp.sum(
        jnp.where(cls_ids == labels, shifted, jnp.float32(0.0)),
        axis=red_axis, keepdims=True)

    ce = lse - true_shifted                                 # per-row CE, (1,tn)/(tn,1)

    if n % tn != 0:
        # Scrub rows of the padded edge tile lying beyond N (select, never multiply,
        # so garbage/NaN in padded rows cannot leak into the sum).
        ce = jnp.where(row_ids + pid * tn < n, ce, jnp.float32(0.0))

    # Per-block partial sum, written to this block's own aligned (8,128) output tile.
    # Distinct block per grid step -> safe under "parallel" (v7x megacore split).
    partial = jnp.sum(ce, keepdims=True).reshape(1, 1)
    out_ref[...] = jnp.broadcast_to(partial, out_ref.shape)


def make_tw_loss_small(num_bands: int = 10, lambda_: float = 0.01,
                       max_tile_n: int = 8192, exp_in_bf16: bool = False):
    """Returns (logits, labels, ternarized_weights_sum) -> scalar loss matching TWLossSmall."""

    def tw_loss_small(logits: jax.Array, labels: jax.Array, tws) -> jax.Array:
        n, c = logits.shape
        itemsize = jnp.dtype(logits.dtype).itemsize
        tn = _choose_tile_n(n, c, itemsize, max_tile_n)
        num_blocks = (n + tn - 1) // tn
        transpose_tile = c <= 64      # lane padding >= 2x -> use the lane-dense path

        if transpose_tile:
            labels_2d = labels.astype(jnp.int32).reshape(1, n)   # lane-dense labels
            labels_spec = pl.BlockSpec((1, tn), lambda i: (0, i))
        else:
            labels_2d = labels.astype(jnp.int32).reshape(n, 1)
            labels_spec = pl.BlockSpec((tn, 1), lambda i: (i, 0))

        kernel = functools.partial(
            _tw_ce_kernel, n=n, tn=tn, c=c,
            transpose_tile=transpose_tile, exp_in_bf16=exp_in_bf16)

        cost = pl.CostEstimate(
            flops=6 * n * c,
            transcendentals=n * (c + 1),
            bytes_accessed=n * c * itemsize + n * 4 + num_blocks * 8 * 128 * 4)

        out = pl.pallas_call(
            kernel,
            out_shape=jax.ShapeDtypeStruct((8, 128 * num_blocks), jnp.float32),
            grid_spec=pltpu.PrefetchScalarGridSpec(
                num_scalar_prefetch=0,
                grid=(num_blocks,),
                in_specs=[
                    pl.BlockSpec((tn, c), lambda i: (i, 0)),   # logits tile (native dtype)
                    labels_spec,                               # labels tile
                ],
                out_specs=pl.BlockSpec((8, 128), lambda i: (0, i)),
            ),
            compiler_params=pltpu.CompilerParams(
                dimension_semantics=("parallel",),             # independent blocks; 2-TC on v7x
                vmem_limit_bytes=32 * 1024 * 1024,
            ),
            cost_estimate=cost,
        )(logits, labels_2d)                                   # logits in native dtype

        # Tiny epilogue in the wrapper: mean over N plus the scalar regularizer.
        ce_sum = jnp.sum(out[0, ::128])                        # one partial per block
        ce_mean = ce_sum * jnp.float32(1.0 / n)
        tws_f = jnp.asarray(tws, dtype=jnp.float32)
        reg = (tws_f - jnp.float32(num_bands)) ** 2
        return ce_mean + jnp.float32(lambda_) * reg

    return tw_loss_small


def _reference(logits, labels, tws, num_bands=10, lambda_=0.01):
    # Pure-JAX reference for sanity checking.
    logp = jax.nn.log_softmax(logits.astype(jnp.float32), axis=-1)
    ce = -jnp.mean(logp[jnp.arange(logits.shape[0]), labels])
    return ce + lambda_ * (jnp.asarray(tws, jnp.float32) - num_bands) ** 2


if __name__ == "__main__":
    key = jax.random.PRNGKey(0)
    k1, k2, k3 = jax.random.split(key, 3)

    N, C = 8, 10  # batch=8, num classes = num_bands = 10
    logits = jax.random.normal(k1, (N, C), dtype=jnp.float32)
    labels = jax.random.randint(k2, (N,), 0, C, dtype=jnp.int32)
    tws = jax.random.normal(k3, (), dtype=jnp.float32) * 2.0 + 9.0  # scalar

    loss_fn = make_tw_loss_small(num_bands=10, lambda_=0.01)
    loss = loss_fn(logits, labels, tws)
    jax.block_until_ready(loss)

    ref = _reference(logits, labels, tws)
    assert jnp.allclose(loss, ref, atol=1e-5, rtol=1e-5), (loss, ref)

    print("KERNEL_OK")
</pallas_src>

<mosaic_0001>
module attributes {stable_mosaic.version = 11 : i64} {
  func.func @_tw_ce_kernel(%arg0: i32, %arg1: memref<128x10xf32, #tpu.memory_space<vmem>>, %arg2: memref<1x128xi32, #tpu.memory_space<vmem>>, %arg3: memref<8x128xf32, #tpu.memory_space<vmem>>) attributes {dimension_semantics = [#tpu.dimension_semantics<parallel>], iteration_bounds = array<i64: 1>, scalar_prefetch = 0 : i64, scratch_operands = 0 : i64, tpu.core_type = #tpu.core_type<tc>, window_params = [{transform_indices = @transform_0, window_bounds = array<i64: 128, 10>}, {transform_indices = @transform_1, window_bounds = array<i64: 1, 128>}, {transform_indices = @transform_2, window_bounds = array<i64: 8, 128>}]} {
    %c0 = arith.constant 0 : index
    %c0_0 = arith.constant 0 : index
    %0 = vector.load %arg1[%c0, %c0_0] : memref<128x10xf32, #tpu.memory_space<vmem>>, vector<128x10xf32>
    %c0_1 = arith.constant 0 : index
    %c0_2 = arith.constant 0 : index
    %1 = vector.load %arg2[%c0_1, %c0_2] : memref<1x128xi32, #tpu.memory_space<vmem>>, vector<1x128xi32>
    %2 = tpu.transpose %0, [1, 0] : vector<128x10xf32> -> vector<10x128xf32>
    %3 = tpu.iota {dimensions = array<i32: 0>} : vector<10x128xi32>
    %4 = tpu.iota {dimensions = array<i32: 1>} : vector<1x128xi32>
    %cst = arith.constant dense<0xFF800000> : vector<128xf32>
    %5 = vector.multi_reduction <maximumf>, %2, %cst [0] : vector<10x128xf32> to vector<128xf32>
    %6 = vector.shape_cast %5 : vector<128xf32> to vector<1x128xf32>
    %7 = vector.broadcast %6 : vector<1x128xf32> to vector<10x128xf32>
    %8 = arith.subf %2, %7 : vector<10x128xf32>
    %9 = math.exp %8 : vector<10x128xf32>
    %cst_3 = arith.constant dense<0.000000e+00> : vector<128xf32>
    %10 = vector.multi_reduction <add>, %9, %cst_3 [0] : vector<10x128xf32> to vector<128xf32>
    %11 = vector.shape_cast %10 : vector<128xf32> to vector<1x128xf32>
    %12 = math.log %11 : vector<1x128xf32>
    %13 = vector.broadcast %1 : vector<1x128xi32> to vector<10x128xi32>
    %14 = arith.cmpi eq, %3, %13 : vector<10x128xi32>
    %cst_4 = arith.constant 0.000000e+00 : f32
    %15 = vector.broadcast %cst_4 : f32 to vector<10x128xf32>
    %16 = arith.select %14, %8, %15 : vector<10x128xi1>, vector<10x128xf32>
    %cst_5 = arith.constant dense<0.000000e+00> : vector<128xf32>
    %17 = vector.multi_reduction <add>, %16, %cst_5 [0] : vector<10x128xf32> to vector<128xf32>
    %18 = vector.shape_cast %17 : vector<128xf32> to vector<1x128xf32>
    %19 = arith.subf %12, %18 : vector<1x128xf32>
    %c128_i32 = arith.constant 128 : i32
    %20 = arith.muli %arg0, %c128_i32 : i32
    %21 = vector.broadcast %20 : i32 to vector<1x128xi32>
    %22 = arith.addi %4, %21 : vector<1x128xi32>
    %c8_i32 = arith.constant 8 : i32
    %23 = vector.broadcast %c8_i32 : i32 to vector<1x128xi32>
    %24 = arith.cmpi slt, %22, %23 : vector<1x128xi32>
    %cst_6 = arith.constant 0.000000e+00 : f32
    %25 = vector.broadcast %cst_6 : f32 to vector<1x128xf32>
    %26 = arith.select %24, %19, %25 : vector<1x128xi1>, vector<1x128xf32>
    %27 = vector.shape_cast %26 : vector<1x128xf32> to vector<1x1x128xf32>
    %cst_7 = arith.constant dense<0.000000e+00> : vector<1xf32>
    %28 = vector.multi_reduction <add>, %27, %cst_7 [1, 2] : vector<1x1x128xf32> to vector<1xf32>
    %29 = vector.shape_cast %28 : vector<1xf32> to vector<1x1x1xf32>
    %30 = vector.extract %29[0, 0, 0] : f32 from vector<1x1x1xf32>
    %31 = vector.broadcast %30 : f32 to vector<1x1xf32>
    %32 = vector.shape_cast %31 : vector<1x1xf32> to vector<1x1xf32>
    %33 = vector.broadcast %32 : vector<1x1xf32> to vector<8x128xf32>
    %c0_8 = arith.constant 0 : index
    %c0_9 = arith.constant 0 : index
    %34 = vector.load %arg3[%c0_8, %c0_9] : memref<8x128xf32, #tpu.memory_space<vmem>>, vector<8x128xf32>
    tpu.vector_store %arg3[%c0_8, %c0_9], %33 {strides = array<i32>} : memref<8x128xf32, #tpu.memory_space<vmem>>, vector<8x128xf32>,
    return
  }
  func.func @transform_0(%arg0: i32) -> (i32, i32) {
    %c0_i32 = arith.constant 0 : i32
    %c0_i32_0 = arith.constant 0 : i32
    return %arg0, %c0_i32 : i32, i32
  }
  func.func @transform_1(%arg0: i32) -> (i32, i32) {
    %c0_i32 = arith.constant 0 : i32
    %c0_i32_0 = arith.constant 0 : i32
    return %c0_i32, %arg0 : i32, i32
  }
  func.func @transform_2(%arg0: i32) -> (i32, i32) {
    %c0_i32 = arith.constant 0 : i32
    %c0_i32_0 = arith.constant 0 : i32
    return %c0_i32, %arg0 : i32, i32
  }
}

</mosaic_0001>

<llo_original>
// kernel: tpu_custom_call.1
$region0: #{tpu_custom_call.1}
  #allocation0 [shape = 'u32[]', space=smem, size = 0x4, offset = 0x4, fixed_abs, tag = 'smem constant byte address 0x4 - core index']
  #allocation1 [shape = 'u32[144,128]{1,0:T(1,128)}', space=vmem, size = 0x12000, scoped, tag = 'internal scratch']
  %s0 = inlined_call_operand.hbm [shape: f32[8,10], index: 0, kind: input, shape index: {}]
  %s1 = inlined_call_operand.vmem [shape: s32[1,8], index: 1, kind: input, shape index: {}]
  %s2 = inlined_call_operand.hbm [shape: f32[8,128], index: 2, kind: output, shape index: {}]
  %s3 = sld [smem:[#allocation0]]
  $region22: #{tpu_custom_call.1} parent=0
    _
  %s5 = ssub.s32 1, %s3
  %s6 = scalar_select 0, %s5, %s3
  $region1: #{tpu_custom_call.1} parent=0
    #allocation2 [shape = 'u8[65536]{0}', space=vmem, size = 0x10000, scoped, tag = 'input window, operand 0, single buffered']
    #allocation3 [shape = 's32[1]{0}', space=sflag, size = 0x4, scoped, tag = 'scoped memory for tpu_custom_call.1']
    #allocation4 [shape = 's32[1]{0}', space=sflag, size = 0x4, scoped, tag = 'scoped memory for tpu_custom_call.1']
    #allocation5 [shape = 'u8[4096]{0}', space=vmem, size = 0x1000, scoped, tag = 'output window, operand 0, single buffered']
    %7 = vsyncpa [#allocation3], 0
    %8 = vsyncpa [#allocation4], 0
    // Predicated region
    $region2: #{tpu_custom_call.1} parent=1 // pred_check
      _
    $region3: #{tpu_custom_call.1} parent=1 // pred_check_branch
      %10 = sbr.rel (0) target = $region5
    $region4: #{tpu_custom_call.1} parent=1 // pred_region
      %s12 = ssub.s32 2048, 128
      %13 = vsyncadd [#allocation3], %s12
      %s14 = sshll.u32 [#allocation2], 4
      %s15 = int_to_ptr.vmem [resolvable:$true] %s14
      %20 = dma.hbm_to_vmem [thread:$0]  %s0, 128, %s15, [#allocation3], 128, 128, 8
    $region5: #{tpu_custom_call.1} parent=1 // pred_fallthru
      _
    // Predicated region
    $region6: #{tpu_custom_call.1} parent=1 // pred_check
      _
    $region7: #{tpu_custom_call.1} parent=1 // pred_check_branch
      %22 = sbr.rel (0) target = $region9
    $region8: #{tpu_custom_call.1} parent=1 // pred_region
      _
    $region9: #{tpu_custom_call.1} parent=1 // pred_fallthru
      _
    // Predicated region
    $region10: #{tpu_custom_call.1} parent=1 // pred_check
      _
    $region11: #{tpu_custom_call.1} parent=1 // pred_check_branch
      %24 = sbr.rel (0) target = $region13
    $region12: #{tpu_custom_call.1} parent=1 // pred_region
      %25 = dma.done [#allocation3], 2048
    $region13: #{tpu_custom_call.1} parent=1 // pred_fallthru
      _
    %v26 = vld [vmem:[#allocation2] sm:$0xff]
    %v27 = vld [vmem:[#allocation2 + $0x8] sm:$0xff]
    %v28 = vld [vmem:[#allocation2 + $0x10] sm:$0xff]
    %v29 = vld [vmem:[#allocation2 + $0x18] sm:$0xff]
    %v30 = vld [vmem:[#allocation2 + $0x20] sm:$0xff]
    %v31 = vld [vmem:[#allocation2 + $0x28] sm:$0xff]
    %v32 = vld [vmem:[#allocation2 + $0x30] sm:$0xff]
    %v33 = vld [vmem:[#allocation2 + $0x38] sm:$0xff]
    %v34 = vld [vmem:[#allocation2 + $0x40] sm:$0xff]
    %v35 = vld [vmem:[#allocation2 + $0x48] sm:$0xff]
    %v36 = vld [vmem:[#allocation2 + $0x50] sm:$0xff]
    %v37 = vld [vmem:[#allocation2 + $0x58] sm:$0xff]
    %v38 = vld [vmem:[#allocation2 + $0x60] sm:$0xff]
    %v39 = vld [vmem:[#allocation2 + $0x68] sm:$0xff]
    %v40 = vld [vmem:[#allocation2 + $0x70] sm:$0xff]
    %v41 = vld [vmem:[#allocation2 + $0x78] sm:$0xff]
    %v42 = vld [vmem:[%s1] sm:$0x1]
    %43 = vxpose.xlu0.b32.start [1/16] %v26, 128
    %44 = vxpose.xlu0.b32.cont [2/16] %v27, 128
    %45 = vxpose.xlu0.b32.cont [3/16] %v28, 128
    %46 = vxpose.xlu0.b32.cont [4/16] %v29, 128
    %47 = vxpose.xlu0.b32.cont [5/16] %v30, 128
    %48 = vxpose.xlu0.b32.cont [6/16] %v31, 128
    %49 = vxpose.xlu0.b32.cont [7/16] %v32, 128
    %50 = vxpose.xlu0.b32.cont [8/16] %v33, 128
    %51 = vxpose.xlu0.b32.cont [9/16] %v34, 128
    %52 = vxpose.xlu0.b32.cont [10/16] %v35, 128
    %53 = vxpose.xlu0.b32.cont [11/16] %v36, 128
    %54 = vxpose.xlu0.b32.cont [12/16] %v37, 128
    %55 = vxpose.xlu0.b32.cont [13/16] %v38, 128
    %56 = vxpose.xlu0.b32.cont [14/16] %v39, 128
    %57 = vxpose.xlu0.b32.cont [15/16] %v40, 128
    %58 = vxpose.xlu0.b32.end [16/16] %v41, 128
    %v59 = vpop.trf.xlu0
    %v60 = vpop.trf.xlu0
    %v61 = vpop.trf.xlu0
    %v62 = vpop.trf.xlu0
    %v63 = vpop.trf.xlu0
    %v64 = vpop.trf.xlu0
    %v65 = vpop.trf.xlu0
    %v66 = vpop.trf.xlu0
    %v67 = vpop.trf.xlu0
    %v68 = vpop.trf.xlu0
    %v69 = vpop.trf.xlu0
    %v70 = vpop.trf.xlu0
    %v71 = vpop.trf.xlu0
    %v72 = vpop.trf.xlu0
    %v73 = vpop.trf.xlu0
    %v74 = vpop.trf.xlu0
    %v75 = vlaneseq
    %v76 = vshrl.u32 %v75, 7
    %v77 = vadd.s32 %v76, 8
    %v78 = vlaneseq
    %v79 = vand.u32 %v78, 127
    %vm80 = vcmask 1041408
    %v81 = vsel %vm80, %v60, -inf
    %v82 = vmax.f32 %v59, %v81
    %v83 = vrot.slane %v82, 4
    %v84 = vmax.f32 %v82, %v83
    %v85 = vrot.slane %v84, 2
    %v86 = vmax.f32 %v84, %v85
    %v87 = vrot.slane %v86, 1
    %v88 = vmax.f32 %v86, %v87
    %v89 = vsub.f32 %v59, %v88
    %v90 = vsub.f32 %v60, %v88
    %v91 = vmul.f32 %v89, 1.442695
    %v92 = vpow.pop %v91
    %v93 = vmul.f32 %v90, 1.442695
    %v94 = vpow.pop %v93
    %v95 = vsel %vm80, %v94, 0.0
    %v96 = vadd.f32 %v92, %v95
    %v97 = vrot.slane %v96, 4
    %v98 = vadd.f32 %v96, %v97
    %v99 = vrot.slane %v98, 2
    %v100 = vadd.f32 %v98, %v99
    %v101 = vrot.slane %v100, 1
    %v102 = vadd.f32 %v100, %v101
    %v103 = vlog2.pop %v102
    %v104 = vmul.f32 %v103, 0.6931472
    %v105 = vlaneseq
    %v106 = vshrl.u32 %v105, 7
    %v107 = vsub.s32 0, %v106
    %v108 = vrot.slane %v42, %v107
    %vm109 = vcmp.eq.s32.totalorder %v76, %v108
    %vm110 = vcmp.eq.s32.totalorder %v77, %v108
    %v111 = vsel %vm109, %v89, 0.0
    %v112 = vsel %vm110, %v90, 0.0
    %v113 = vsel %vm80, %v112, 0.0
    %v114 = vadd.f32 %v111, %v113
    %v115 = vrot.slane %v114, 4
    %v116 = vadd.f32 %v114, %v115
    %v117 = vrot.slane %v116, 2
    %v118 = vadd.f32 %v116, %v117
    %v119 = vrot.slane %v118, 1
    %v120 = vadd.f32 %v118, %v119
    %v121 = vsub.f32 %v104, %v120
    %s122 = smul.u32 0, 128
    %v123 = vstv %s122
    %v124 = vadd.s32 %v79, %v123
    %vm125 = vcmp.lt.s32.totalorder %v124, 8
    %v126 = vsel %vm125, %v121, 0.0
    %vm127 = vcmask 1040384
    %v128 = vsel %vm127, %v126, 0.0
    %129 = vadd.xlane.f32.xlu0 %v128
    %v130 = vpop.xlane.xlu0 %129
    %v131 = vrot.slane %v130, 4
    %v132 = vadd.f32 %v130, %v131
    %v133 = vrot.slane %v132, 2
    %v134 = vadd.f32 %v132, %v133
    %v135 = vrot.slane %v134, 1
    %v136 = vadd.f32 %v134, %v135
    %s137 = vtos %v136
    %v138 = vstv %s137
    %139 = vst [vmem:[#allocation5] sm:$0xff] %v138
    // Predicated region
    $region14: #{tpu_custom_call.1} parent=1 // pred_check
      _
    $region15: #{tpu_custom_call.1} parent=1 // pred_check_branch
      %141 = sbr.rel (0) target = $region17
    $region16: #{tpu_custom_call.1} parent=1 // pred_region
      %s143 = ssub.s32 128, 128
      %144 = vsyncadd [#allocation4], %s143
      %s146 = sshll.u32 [#allocation5], 4
      %s147 = int_to_ptr.vmem [resolvable:$true] %s146
      %149 = dma.vmem_to_hbm [thread:$0]  %s147, 128, %s2, [#allocation4]
    $region17: #{tpu_custom_call.1} parent=1 // pred_fallthru
      _
    // Predicated region
    $region18: #{tpu_custom_call.1} parent=1 // pred_check
      _
    $region19: #{tpu_custom_call.1} parent=1 // pred_check_branch
      %151 = sbr.rel (0) target = $region21
    $region20: #{tpu_custom_call.1} parent=1 // pred_region
      %152 = dma.done [#allocation4], 128
    $region21: #{tpu_custom_call.1} parent=1 // pred_fallthru
      _
    %153 = vsyncpa [#allocation3], 1
    %154 = vsyncpa [#allocation4], 1

</llo_original>
